<compile_context>
chip_gen: v5e
topology: v5e:2x2
jax: 0.10.0
libtpu: 0.0.40
codegen_flags: <defaults>
</compile_context>

<pallas_src>
import jax
import jax.numpy as jnp
from jax.experimental import pallas as pl
from jax.experimental.pallas import tpu as pltpu


def _net_kernel(patches_ref, wc_ref, bc_ref, w1_ref, b1_ref, w2_ref, b2_ref,
                out_ref):
    nb = out_ref.shape[0]                       # samples in this batch block
    cout = wc_ref.shape[0]
    s = w1_ref.shape[0] // cout                 # pooled spatial size Hp*Wp
    pp = patches_ref.shape[0]                   # pooling*pooling offsets

    wc = wc_ref[...]                            # (Cout, Cin*K*K), loaded once

    # Conv as pp lane-dense MXU dots (one per pool offset), max-pool fused into
    # the accumulation.  Each dot is (Cout, Cin*K*K) @ (Cin*K*K, NB*S) and each
    # maximum is a full-width, 128-lane-aligned VPU op.
    pooled = jnp.dot(wc, patches_ref[0], preferred_element_type=jnp.float32)
    for q in range(1, pp):
        pooled = jnp.maximum(
            pooled,
            jnp.dot(wc, patches_ref[q], preferred_element_type=jnp.float32))

    # Bias + ReLU once, after the max (both commute with max).
    pooled = jnp.maximum(pooled + bc_ref[...], 0.0)     # (Cout, NB*S)

    # NCHW flatten (column index c*S + s per sample), built in registers with
    # static slices + concatenation — no scatter stores, no VMEM scratch.
    rows = []
    for n in range(nb):                         # static, small at these shapes
        base = n * s
        rows.append(jnp.concatenate(
            [pooled[c:c + 1, base:base + s] for c in range(cout)], axis=1))
    flat = jnp.concatenate(rows, axis=0) if nb > 1 else rows[0]   # (nb, Cout*S)

    # fc1 as ONE matmul over the flattened features, then ReLU.
    h = jnp.dot(flat, w1_ref[...], preferred_element_type=jnp.float32)
    h = jnp.maximum(h + b1_ref[...], 0.0)       # (nb, hidden)

    # fc2 + sigmoid on the VPU/XLU: multiply by the transposed fc2 weight row,
    # reduce over lanes, add the SMEM scalar bias.
    z = jnp.sum(h * w2_ref[...], axis=1, keepdims=True) + b2_ref[0]
    sig = 1.0 / (1.0 + jnp.exp(-z))             # (nb, 1)

    # Lane-dense (padded) output block: unmasked store, host keeps column 0.
    out_ref[...] = jnp.broadcast_to(sig, out_ref.shape)


def _im2col(x, K, pad, pool):
    """(N,Cin,H,W) -> (pp, Cin*K*K, N*Hp*Wp).

    Leading dim = pool offset (ph*pool+pw); contraction rows ordered
    (ci, kh, kw) to match Wc.reshape(Cout, Cin*K*K); lanes ordered (n, s).
    """
    N, Cin, H, W = x.shape
    Hc, Wc = H + 2 * pad - K + 1, W + 2 * pad - K + 1
    Hp, Wp = Hc // pool, Wc // pool
    xp = jnp.pad(x, ((0, 0), (0, 0), (pad, pad), (pad, pad)))
    slabs = []
    for kh in range(K):
        for kw in range(K):
            for ph in range(pool):
                for pw in range(pool):
                    sl = xp[:, :,
                            ph + kh: ph + kh + pool * Hp: pool,
                            pw + kw: pw + kw + pool * Wp: pool]  # (N,Cin,Hp,Wp)
                    slabs.append(sl.reshape(N, Cin, Hp * Wp))
    p = jnp.stack(slabs, axis=0).reshape(K, K, pool * pool, N, Cin, Hp * Wp)
    p = p.transpose(2, 4, 0, 1, 3, 5)            # (pp, Cin, K, K, N, S)
    return p.reshape(pool * pool, Cin * K * K, N * Hp * Wp), Hp, Wp


def _pick_block(N, max_block_n):
    """Pick the batch block size NB.

    Constraints when NB < N: NB % 8 == 0 keeps every BlockSpec tile-aligned
    (patches lane block NB*S is then a multiple of 128 for S=64, and the
    (NB, 128) output block has an 8-aligned sublane dim).  When the whole
    batch fits we still prefer >=2 grid steps (both v7x TensorCores busy) if
    the half batch stays aligned.
    """
    if N <= max_block_n:
        half = N // 2
        if N % 2 == 0 and half >= 8 and half % 8 == 0:
            return half
        return N
    for nb in range(max_block_n, 7, -1):
        if N % nb == 0 and nb % 8 == 0:
            return nb
    return N                                     # fall back: single block


def net_forward(x, params, padding, pooling, max_block_n=128):
    Wc, bc, W1, b1, W2, b2 = params
    N = x.shape[0]
    Cout, Cin, K, _ = Wc.shape
    patches, Hp, Wp = _im2col(x.astype(jnp.float32), K, padding, pooling)
    pp = pooling * pooling
    kkc = Cin * K * K
    S = Hp * Wp
    hid = W1.shape[1]
    assert W1.shape[0] == Cout * S

    NB = _pick_block(N, max_block_n)
    assert N % NB == 0

    wc_flat = Wc.reshape(Cout, kkc).astype(jnp.float32)   # (ci, kh, kw) order
    bc_col = bc.reshape(Cout, 1).astype(jnp.float32)
    w1 = W1.astype(jnp.float32)                  # rows ordered c*S+s (NCHW flatten)
    b1r = b1.reshape(1, hid).astype(jnp.float32)
    w2r = W2.reshape(1, hid).astype(jnp.float32)          # transposed fc2 weights
    b2s = b2.reshape(1).astype(jnp.float32)

    out_padded = pl.pallas_call(
        _net_kernel,
        out_shape=jax.ShapeDtypeStruct((N, 128), jnp.float32),
        grid=(N // NB,),
        in_specs=[
            pl.BlockSpec((pp, kkc, NB * S), lambda b: (0, 0, b)),
            pl.BlockSpec((Cout, kkc), lambda b: (0, 0)),
            pl.BlockSpec((Cout, 1), lambda b: (0, 0)),
            pl.BlockSpec((Cout * S, hid), lambda b: (0, 0)),
            pl.BlockSpec((1, hid), lambda b: (0, 0)),
            pl.BlockSpec((1, hid), lambda b: (0, 0)),
            pl.BlockSpec(memory_space=pltpu.MemorySpace.SMEM),
        ],
        out_specs=pl.BlockSpec((NB, 128), lambda b: (b, 0)),
        compiler_params=pltpu.CompilerParams(
            dimension_semantics=("parallel",),
            vmem_limit_bytes=32 * 1024 * 1024),
    )(patches, wc_flat, bc_col, w1, b1r, w2r, b2s)
    return out_padded[:, :1]


def net_reference(x, params, padding, pooling):
    """Pure-JAX reference mirroring the PyTorch forward (NCHW)."""
    Wc, bc, W1, b1, W2, b2 = params
    y = jax.lax.conv_general_dilated(
        x, Wc, window_strides=(1, 1), padding=[(padding, padding)] * 2,
        dimension_numbers=("NCHW", "OIHW", "NCHW"),
        precision=jax.lax.Precision.HIGHEST)
    y = jax.nn.relu(y + bc.reshape(1, -1, 1, 1))
    y = jax.lax.reduce_window(y, -jnp.inf, jax.lax.max,
                              (1, 1, pooling, pooling),
                              (1, 1, pooling, pooling), "VALID")
    f = y.reshape(x.shape[0], -1)                 # NCHW flatten: (c, hp, wp)
    h = jax.nn.relu(jnp.dot(f, W1, precision=jax.lax.Precision.HIGHEST) + b1)
    z = jnp.dot(h, W2, precision=jax.lax.Precision.HIGHEST) + b2
    return jax.nn.sigmoid(z)


if __name__ == "__main__":
    # Net(depth=4, nk=8, kernel_size=3, padding=1, hidden_neurons=32, nc=8); pooling=2
    depth, nk, K, padding, hidden, pooling = 4, 8, 3, 1, 32, 2
    N, H, W = 2, 16, 16
    nc = (H + 2 * padding - K + 1) // pooling     # = 8 (pooled spatial size)

    key = jax.random.PRNGKey(0)
    ks = jax.random.split(key, 7)
    x = jax.random.normal(ks[0], (N, depth, H, W), jnp.float32)
    # Deterministic synthetic parameters (fc weights stored as (in, out) here).
    Wc = 0.1 * jax.random.normal(ks[1], (nk, depth, K, K), jnp.float32)
    bc = 0.1 * jax.random.normal(ks[2], (nk,), jnp.float32)
    W1 = 0.05 * jax.random.normal(ks[3], (nc * nc * nk, hidden), jnp.float32)
    b1 = 0.1 * jax.random.normal(ks[4], (hidden,), jnp.float32)
    W2 = 0.1 * jax.random.normal(ks[5], (hidden, 1), jnp.float32)
    b2 = 0.1 * jax.random.normal(ks[6], (1,), jnp.float32)
    params = (Wc, bc, W1, b1, W2, b2)

    out = jax.block_until_ready(net_forward(x, params, padding, pooling))
    ref = net_reference(x, params, padding, pooling)
    assert out.shape == (N, 1)
    assert jnp.allclose(out, ref, atol=2e-4, rtol=2e-4), (out, ref)
    print("KERNEL_OK")
</pallas_src>

<mosaic_0001>
module attributes {stable_mosaic.version = 11 : i64} {
  func.func @_net_kernel(%arg0: i32, %arg1: memref<4x36x128xf32, #tpu.memory_space<vmem>>, %arg2: memref<8x36xf32, #tpu.memory_space<vmem>>, %arg3: memref<8x1xf32, #tpu.memory_space<vmem>>, %arg4: memref<512x32xf32, #tpu.memory_space<vmem>>, %arg5: memref<1x32xf32, #tpu.memory_space<vmem>>, %arg6: memref<1x32xf32, #tpu.memory_space<vmem>>, %arg7: memref<1xf32, #tpu.memory_space<smem>>, %arg8: memref<2x128xf32, #tpu.memory_space<vmem>>) attributes {dimension_semantics = [#tpu.dimension_semantics<parallel>], iteration_bounds = array<i64: 1>, scalar_prefetch = 0 : i64, scratch_operands = 0 : i64, tpu.core_type = #tpu.core_type<tc>, window_params = [{transform_indices = @transform_0, window_bounds = array<i64: 4, 36, 128>}, {pipeline_mode = #tpu.pipeline_mode<synchronous>, transform_indices = @transform_1, window_bounds = array<i64: 8, 36>}, {pipeline_mode = #tpu.pipeline_mode<synchronous>, transform_indices = @transform_2, window_bounds = array<i64: 8, 1>}, {pipeline_mode = #tpu.pipeline_mode<synchronous>, transform_indices = @transform_3, window_bounds = array<i64: 512, 32>}, {pipeline_mode = #tpu.pipeline_mode<synchronous>, transform_indices = @transform_4, window_bounds = array<i64: 1, 32>}, {pipeline_mode = #tpu.pipeline_mode<synchronous>, transform_indices = @transform_5, window_bounds = array<i64: 1, 32>}, {transform_indices = @transform_6, window_bounds = array<i64: 1>}, {transform_indices = @transform_7, window_bounds = array<i64: 2, 128>}]} {
    %c0 = arith.constant 0 : index
    %c0_0 = arith.constant 0 : index
    %0 = vector.load %arg2[%c0, %c0_0] : memref<8x36xf32, #tpu.memory_space<vmem>>, vector<8x36xf32>
    %c0_1 = arith.constant 0 : index
    %c0_2 = arith.constant 0 : index
    %c0_3 = arith.constant 0 : index
    %1 = vector.load %arg1[%c0_1, %c0_2, %c0_3] : memref<4x36x128xf32, #tpu.memory_space<vmem>>, vector<1x36x128xf32>
    %2 = vector.shape_cast %1 : vector<1x36x128xf32> to vector<36x128xf32>
    %cst = arith.constant dense<0.000000e+00> : vector<8x128xf32>
    %3 = tpu.matmul %0, %2, %cst {dimension_numbers = #tpu.dot_dimension_numbers<[1], [0], [0], [1], [0, 0, 1, 1], [], []>} : vector<8x36xf32>, vector<36x128xf32>, vector<8x128xf32> -> vector<8x128xf32>
    %c1 = arith.constant 1 : index
    %c0_4 = arith.constant 0 : index
    %c0_5 = arith.constant 0 : index
    %4 = vector.load %arg1[%c1, %c0_4, %c0_5] : memref<4x36x128xf32, #tpu.memory_space<vmem>>, vector<1x36x128xf32>
    %5 = vector.shape_cast %4 : vector<1x36x128xf32> to vector<36x128xf32>
    %cst_6 = arith.constant dense<0.000000e+00> : vector<8x128xf32>
    %6 = tpu.matmul %0, %5, %cst_6 {dimension_numbers = #tpu.dot_dimension_numbers<[1], [0], [0], [1], [0, 0, 1, 1], [], []>} : vector<8x36xf32>, vector<36x128xf32>, vector<8x128xf32> -> vector<8x128xf32>
    %7 = arith.maximumf %3, %6 : vector<8x128xf32>
    %c2 = arith.constant 2 : index
    %c0_7 = arith.constant 0 : index
    %c0_8 = arith.constant 0 : index
    %8 = vector.load %arg1[%c2, %c0_7, %c0_8] : memref<4x36x128xf32, #tpu.memory_space<vmem>>, vector<1x36x128xf32>
    %9 = vector.shape_cast %8 : vector<1x36x128xf32> to vector<36x128xf32>
    %cst_9 = arith.constant dense<0.000000e+00> : vector<8x128xf32>
    %10 = tpu.matmul %0, %9, %cst_9 {dimension_numbers = #tpu.dot_dimension_numbers<[1], [0], [0], [1], [0, 0, 1, 1], [], []>} : vector<8x36xf32>, vector<36x128xf32>, vector<8x128xf32> -> vector<8x128xf32>
    %11 = arith.maximumf %7, %10 : vector<8x128xf32>
    %c3 = arith.constant 3 : index
    %c0_10 = arith.constant 0 : index
    %c0_11 = arith.constant 0 : index
    %12 = vector.load %arg1[%c3, %c0_10, %c0_11] : memref<4x36x128xf32, #tpu.memory_space<vmem>>, vector<1x36x128xf32>
    %13 = vector.shape_cast %12 : vector<1x36x128xf32> to vector<36x128xf32>
    %cst_12 = arith.constant dense<0.000000e+00> : vector<8x128xf32>
    %14 = tpu.matmul %0, %13, %cst_12 {dimension_numbers = #tpu.dot_dimension_numbers<[1], [0], [0], [1], [0, 0, 1, 1], [], []>} : vector<8x36xf32>, vector<36x128xf32>, vector<8x128xf32> -> vector<8x128xf32>
    %15 = arith.maximumf %11, %14 : vector<8x128xf32>
    %c0_13 = arith.constant 0 : index
    %c0_14 = arith.constant 0 : index
    %16 = vector.load %arg3[%c0_13, %c0_14] : memref<8x1xf32, #tpu.memory_space<vmem>>, vector<8x1xf32>
    %17 = vector.broadcast %16 : vector<8x1xf32> to vector<8x128xf32>
    %18 = arith.addf %15, %17 : vector<8x128xf32>
    %cst_15 = arith.constant 0.000000e+00 : f32
    %19 = vector.broadcast %cst_15 : f32 to vector<8x128xf32>
    %20 = arith.maximumf %18, %19 : vector<8x128xf32>
    %21 = vector.extract_strided_slice %20 {offsets = [0, 0], sizes = [1, 64], strides = [1, 1]} : vector<8x128xf32> to vector<1x64xf32>
    %22 = vector.extract_strided_slice %20 {offsets = [1, 0], sizes = [1, 64], strides = [1, 1]} : vector<8x128xf32> to vector<1x64xf32>
    %23 = vector.extract_strided_slice %20 {offsets = [2, 0], sizes = [1, 64], strides = [1, 1]} : vector<8x128xf32> to vector<1x64xf32>
    %24 = vector.extract_strided_slice %20 {offsets = [3, 0], sizes = [1, 64], strides = [1, 1]} : vector<8x128xf32> to vector<1x64xf32>
    %25 = vector.extract_strided_slice %20 {offsets = [4, 0], sizes = [1, 64], strides = [1, 1]} : vector<8x128xf32> to vector<1x64xf32>
    %26 = vector.extract_strided_slice %20 {offsets = [5, 0], sizes = [1, 64], strides = [1, 1]} : vector<8x128xf32> to vector<1x64xf32>
    %27 = vector.extract_strided_slice %20 {offsets = [6, 0], sizes = [1, 64], strides = [1, 1]} : vector<8x128xf32> to vector<1x64xf32>
    %28 = vector.extract_strided_slice %20 {offsets = [7, 0], sizes = [1, 64], strides = [1, 1]} : vector<8x128xf32> to vector<1x64xf32>
    %29 = tpu.concatenate %21, %22, %23, %24, %25, %26, %27, %28 in 1 : vector<1x64xf32>, vector<1x64xf32>, vector<1x64xf32>, vector<1x64xf32>, vector<1x64xf32>, vector<1x64xf32>, vector<1x64xf32>, vector<1x64xf32> -> vector<1x512xf32>
    %30 = vector.extract_strided_slice %20 {offsets = [0, 64], sizes = [1, 64], strides = [1, 1]} : vector<8x128xf32> to vector<1x64xf32>
    %31 = vector.extract_strided_slice %20 {offsets = [1, 64], sizes = [1, 64], strides = [1, 1]} : vector<8x128xf32> to vector<1x64xf32>
    %32 = vector.extract_strided_slice %20 {offsets = [2, 64], sizes = [1, 64], strides = [1, 1]} : vector<8x128xf32> to vector<1x64xf32>
    %33 = vector.extract_strided_slice %20 {offsets = [3, 64], sizes = [1, 64], strides = [1, 1]} : vector<8x128xf32> to vector<1x64xf32>
    %34 = vector.extract_strided_slice %20 {offsets = [4, 64], sizes = [1, 64], strides = [1, 1]} : vector<8x128xf32> to vector<1x64xf32>
    %35 = vector.extract_strided_slice %20 {offsets = [5, 64], sizes = [1, 64], strides = [1, 1]} : vector<8x128xf32> to vector<1x64xf32>
    %36 = vector.extract_strided_slice %20 {offsets = [6, 64], sizes = [1, 64], strides = [1, 1]} : vector<8x128xf32> to vector<1x64xf32>
    %37 = vector.extract_strided_slice %20 {offsets = [7, 64], sizes = [1, 64], strides = [1, 1]} : vector<8x128xf32> to vector<1x64xf32>
    %38 = tpu.concatenate %30, %31, %32, %33, %34, %35, %36, %37 in 1 : vector<1x64xf32>, vector<1x64xf32>, vector<1x64xf32>, vector<1x64xf32>, vector<1x64xf32>, vector<1x64xf32>, vector<1x64xf32>, vector<1x64xf32> -> vector<1x512xf32>
    %39 = tpu.concatenate %29, %38 in 0 : vector<1x512xf32>, vector<1x512xf32> -> vector<2x512xf32>
    %c0_16 = arith.constant 0 : index
    %c0_17 = arith.constant 0 : index
    %40 = vector.load %arg4[%c0_16, %c0_17] : memref<512x32xf32, #tpu.memory_space<vmem>>, vector<512x32xf32>
    %cst_18 = arith.constant dense<0.000000e+00> : vector<2x32xf32>
    %41 = tpu.matmul %39, %40, %cst_18 {dimension_numbers = #tpu.dot_dimension_numbers<[1], [0], [0], [1], [0, 0, 1, 1], [], []>} : vector<2x512xf32>, vector<512x32xf32>, vector<2x32xf32> -> vector<2x32xf32>
    %c0_19 = arith.constant 0 : index
    %c0_20 = arith.constant 0 : index
    %42 = vector.load %arg5[%c0_19, %c0_20] : memref<1x32xf32, #tpu.memory_space<vmem>>, vector<1x32xf32>
    %43 = vector.broadcast %42 : vector<1x32xf32> to vector<2x32xf32>
    %44 = arith.addf %41, %43 : vector<2x32xf32>
    %cst_21 = arith.constant 0.000000e+00 : f32
    %45 = vector.broadcast %cst_21 : f32 to vector<2x32xf32>
    %46 = arith.maximumf %44, %45 : vector<2x32xf32>
    %c0_22 = arith.constant 0 : index
    %c0_23 = arith.constant 0 : index
    %47 = vector.load %arg6[%c0_22, %c0_23] : memref<1x32xf32, #tpu.memory_space<vmem>>, vector<1x32xf32>
    %48 = vector.broadcast %47 : vector<1x32xf32> to vector<2x32xf32>
    %49 = arith.mulf %46, %48 : vector<2x32xf32>
    %cst_24 = arith.constant dense<0.000000e+00> : vector<2xf32>
    %50 = vector.multi_reduction <add>, %49, %cst_24 [1] : vector<2x32xf32> to vector<2xf32>
    %51 = vector.shape_cast %50 : vector<2xf32> to vector<2x1xf32>
    %c0_25 = arith.constant 0 : index
    %52 = memref.load %arg7[%c0_25] : memref<1xf32, #tpu.memory_space<smem>>
    %53 = vector.broadcast %52 : f32 to vector<2x1xf32>
    %54 = arith.addf %51, %53 : vector<2x1xf32>
    %cst_26 = arith.constant 0.000000e+00 : f32
    %55 = vector.broadcast %cst_26 : f32 to vector<2x1xf32>
    %56 = arith.subf %55, %54 : vector<2x1xf32>
    %57 = math.exp %56 : vector<2x1xf32>
    %cst_27 = arith.constant 1.000000e+00 : f32
    %58 = vector.broadcast %cst_27 : f32 to vector<2x1xf32>
    %59 = arith.addf %58, %57 : vector<2x1xf32>
    %cst_28 = arith.constant 1.000000e+00 : f32
    %60 = vector.broadcast %cst_28 : f32 to vector<2x1xf32>
    %61 = arith.divf %60, %59 : vector<2x1xf32>
    %62 = vector.shape_cast %61 : vector<2x1xf32> to vector<2x1xf32>
    %63 = vector.broadcast %62 : vector<2x1xf32> to vector<2x128xf32>
    %c0_29 = arith.constant 0 : index
    %c0_30 = arith.constant 0 : index
    %64 = vector.load %arg8[%c0_29, %c0_30] : memref<2x128xf32, #tpu.memory_space<vmem>>, vector<2x128xf32>
    tpu.vector_store %arg8[%c0_29, %c0_30], %63 {strides = array<i32>} : memref<2x128xf32, #tpu.memory_space<vmem>>, vector<2x128xf32>,
    return
  }
  func.func @transform_0(%arg0: i32) -> (i32, i32, i32) {
    %c0_i32 = arith.constant 0 : i32
    %c0_i32_0 = arith.constant 0 : i32
    %c0_i32_1 = arith.constant 0 : i32
    return %c0_i32, %c0_i32_0, %arg0 : i32, i32, i32
  }
  func.func @transform_1(%arg0: i32) -> (i32, i32) {
    %c0_i32 = arith.constant 0 : i32
    %c0_i32_0 = arith.constant 0 : i32
    %c0_i32_1 = arith.constant 0 : i32
    return %c0_i32, %c0_i32_0 : i32, i32
  }
  func.func @transform_2(%arg0: i32) -> (i32, i32) {
    %c0_i32 = arith.constant 0 : i32
    %c0_i32_0 = arith.constant 0 : i32
    %c0_i32_1 = arith.constant 0 : i32
    return %c0_i32, %c0_i32_0 : i32, i32
  }
  func.func @transform_3(%arg0: i32) -> (i32, i32) {
    %c0_i32 = arith.constant 0 : i32
    %c0_i32_0 = arith.constant 0 : i32
    %c0_i32_1 = arith.constant 0 : i32
    return %c0_i32, %c0_i32_0 : i32, i32
  }
  func.func @transform_4(%arg0: i32) -> (i32, i32) {
    %c0_i32 = arith.constant 0 : i32
    %c0_i32_0 = arith.constant 0 : i32
    %c0_i32_1 = arith.constant 0 : i32
    return %c0_i32, %c0_i32_0 : i32, i32
  }
  func.func @transform_5(%arg0: i32) -> (i32, i32) {
    %c0_i32 = arith.constant 0 : i32
    %c0_i32_0 = arith.constant 0 : i32
    %c0_i32_1 = arith.constant 0 : i32
    return %c0_i32, %c0_i32_0 : i32, i32
  }
  func.func @transform_6(%arg0: i32) -> i32 {
    %c0_i32 = arith.constant 0 : i32
    %c0_i32_0 = arith.constant 0 : i32
    return %c0_i32 : i32
  }
  func.func @transform_7(%arg0: i32) -> (i32, i32) {
    %c0_i32 = arith.constant 0 : i32
    %c0_i32_0 = arith.constant 0 : i32
    return %arg0, %c0_i32 : i32, i32
  }
}

</mosaic_0001>

<llo_original>
// kernel: tpu_custom_call.1
$region0: #{tpu_custom_call.1}
  #allocation0 [shape = 'u32[]', space=smem, size = 0x4, offset = 0x4, fixed_abs, tag = 'smem constant byte address 0x4 - core index']
  #allocation1 [shape = 'u32[72,128]{1,0:T(1,128)}', space=vmem, size = 0x9000, scoped, tag = 'internal scratch']
  #allocation2 [shape = 'f32[1]{0:T(128)S(6)}', space=smem, size = 0x200, scoped, tag = 'scoped memory for tpu_custom_call.1']
  %s0 = inlined_call_operand.vmem [shape: f32[4,36,128], index: 0, kind: input, shape index: {}]
  %s1 = inlined_call_operand.vmem [shape: f32[8,36], index: 1, kind: input, shape index: {}]
  %s2 = inlined_call_operand.vmem [shape: f32[8,1], index: 2, kind: input, shape index: {}]
  %s3 = inlined_call_operand.vmem [shape: f32[512,32], index: 3, kind: input, shape index: {}]
  %s4 = inlined_call_operand.vmem [shape: f32[1,32], index: 4, kind: input, shape index: {}]
  %s5 = inlined_call_operand.vmem [shape: f32[1,32], index: 5, kind: input, shape index: {}]
  %s6 = inlined_call_operand.<no memory space> [shape: f32[1], index: 6, kind: input, shape index: {}]
  %s7 = inlined_call_operand.hbm [shape: f32[2,128], index: 7, kind: output, shape index: {}]
  %s8 = sld [smem:[#allocation0]]
  $region38: #{tpu_custom_call.1} parent=0
    _
  %s10 = ssub.s32 1, %s8
  %s11 = scalar_select 0, %s10, %s8
  %12 = sst [smem:[#allocation2]] %s6
  $region1: #{tpu_custom_call.1} parent=0
    #allocation3 [shape = 'u8[1024]{0}', space=vmem, size = 0x400, scoped, tag = 'output window, operand 0, single buffered']
    #allocation4 [shape = 's32[1]{0}', space=sflag, size = 0x4, scoped, tag = 'scoped memory for tpu_custom_call.1']
    %13 = vsyncpa [#allocation4], 0
    // Predicated region
    $region2: #{tpu_custom_call.1} parent=1 // pred_check
      _
    $region3: #{tpu_custom_call.1} parent=1 // pred_check_branch
      %15 = sbr.rel (0) target = $region5
    $region4: #{tpu_custom_call.1} parent=1 // pred_region
      _
    $region5: #{tpu_custom_call.1} parent=1 // pred_fallthru
      _
    // Predicated region
    $region6: #{tpu_custom_call.1} parent=1 // pred_check
      _
    $region7: #{tpu_custom_call.1} parent=1 // pred_check_branch
      %17 = sbr.rel (0) target = $region9
    $region8: #{tpu_custom_call.1} parent=1 // pred_region
      _
    $region9: #{tpu_custom_call.1} parent=1 // pred_fallthru
      _
    // Predicated region
    $region10: #{tpu_custom_call.1} parent=1 // pred_check
      _
    $region11: #{tpu_custom_call.1} parent=1 // pred_check_branch
      %19 = sbr.rel (0) target = $region13
    $region12: #{tpu_custom_call.1} parent=1 // pred_region
      _
    $region13: #{tpu_custom_call.1} parent=1 // pred_fallthru
      _
    // Predicated region
    $region14: #{tpu_custom_call.1} parent=1 // pred_check
      _
    $region15: #{tpu_custom_call.1} parent=1 // pred_check_branch
      %21 = sbr.rel (0) target = $region17
    $region16: #{tpu_custom_call.1} parent=1 // pred_region
      _
    $region17: #{tpu_custom_call.1} parent=1 // pred_fallthru
      _
    // Predicated region
    $region18: #{tpu_custom_call.1} parent=1 // pred_check
      _
    $region19: #{tpu_custom_call.1} parent=1 // pred_check_branch
      %23 = sbr.rel (0) target = $region21
    $region20: #{tpu_custom_call.1} parent=1 // pred_region
      _
    $region21: #{tpu_custom_call.1} parent=1 // pred_fallthru
      _
    // Predicated region
    $region22: #{tpu_custom_call.1} parent=1 // pred_check
      _
    $region23: #{tpu_custom_call.1} parent=1 // pred_check_branch
      %25 = sbr.rel (0) target = $region25
    $region24: #{tpu_custom_call.1} parent=1 // pred_region
      _
    $region25: #{tpu_custom_call.1} parent=1 // pred_fallthru
      _
    // Predicated region
    $region26: #{tpu_custom_call.1} parent=1 // pred_check
      _
    $region27: #{tpu_custom_call.1} parent=1 // pred_check_branch
      %27 = sbr.rel (0) target = $region29
    $region28: #{tpu_custom_call.1} parent=1 // pred_region
      _
    $region29: #{tpu_custom_call.1} parent=1 // pred_fallthru
      _
    %v28 = vld [vmem:[%s1] sm:$0xff]
    %v29 = vld [vmem:[%s0] sm:$0xff]
    %v30 = vld [vmem:[%s0 + $0x8] sm:$0xff]
    %v31 = vld [vmem:[%s0 + $0x10] sm:$0xff]
    %v32 = vld [vmem:[%s0 + $0x18] sm:$0xff]
    %v33 = vld [vmem:[%s0 + $0x20] sm:$0xf]
    %vm34 = vcmask 293888
    %v36 = vsel %vm34, %v28, 0
    %vm38 = vcmask 1043456
    %v40 = vsel %vm38, %v33, 0
    %42 = vmatpush.msra.mxu0 0.0
    %43 = vmatpush.msra.mxu0 0.0
    %44 = vmatpush.msra.mxu0 0.0
    %45 = vmatpush.msra.mxu0 0.0
    %46 = vmatpush.msra.mxu0 0.0
    %47 = vmatpush.msra.mxu0 0.0
    %48 = vmatpush.msra.mxu0 0.0
    %49 = vmatpush.msra.mxu0 0.0
    %50 = vmatpush.msra.mxu0 0.0
    %51 = vmatpush.msra.mxu0 0.0
    %52 = vmatpush.msra.mxu0 0.0
    %53 = vmatpush.msra.mxu0 %v40
    %54 = vmatpush.msra.mxu0 %v32
    %55 = vmatpush.msra.mxu0 %v31
    %56 = vmatpush.msra.mxu0 %v30
    %57 = vmatpush.msra.mxu0 %v29
    %58 = vmatmul.f32.gmra.mxu0 %v36
    %v59 = vpop.f32.mrf.mxu0
    %v60 = vadd.f32 0.0, %v59
    %61 = vdwg.mxu0
    %s62 = scalar_lea.vmem %s0, 40
    %v63 = vld [vmem:[%s62] sm:$0xff]
    %v64 = vld [vmem:[%s62 + $0x8] sm:$0xff]
    %v65 = vld [vmem:[%s62 + $0x10] sm:$0xff]
    %v66 = vld [vmem:[%s62 + $0x18] sm:$0xff]
    %v67 = vld [vmem:[%s62 + $0x20] sm:$0xf]
    %v69 = vsel %vm38, %v67, 0
    %71 = vmatpush.msra.mxu0 0.0
    %72 = vmatpush.msra.mxu0 0.0
    %73 = vmatpush.msra.mxu0 0.0
    %74 = vmatpush.msra.mxu0 0.0
    %75 = vmatpush.msra.mxu0 0.0
    %76 = vmatpush.msra.mxu0 0.0
    %77 = vmatpush.msra.mxu0 0.0
    %78 = vmatpush.msra.mxu0 0.0
    %79 = vmatpush.msra.mxu0 0.0
    %80 = vmatpush.msra.mxu0 0.0
    %81 = vmatpush.msra.mxu0 0.0
    %82 = vmatpush.msra.mxu0 %v69
    %83 = vmatpush.msra.mxu0 %v66
    %84 = vmatpush.msra.mxu0 %v65
    %85 = vmatpush.msra.mxu0 %v64
    %86 = vmatpush.msra.mxu0 %v63
    %87 = vmatmul.f32.gmra.mxu0 %v36
    %v88 = vpop.f32.mrf.mxu0
    %v89 = vadd.f32 0.0, %v88
    %90 = vdwg.mxu0
    %v91 = vmax.f32 %v60, %v89
    %s92 = scalar_lea.vmem %s0, 80
    %v93 = vld [vmem:[%s92] sm:$0xff]
    %v94 = vld [vmem:[%s92 + $0x8] sm:$0xff]
    %v95 = vld [vmem:[%s92 + $0x10] sm:$0xff]
    %v96 = vld [vmem:[%s92 + $0x18] sm:$0xff]
    %v97 = vld [vmem:[%s92 + $0x20] sm:$0xf]
    %v99 = vsel %vm38, %v97, 0
    %101 = vmatpush.msra.mxu0 0.0
    %102 = vmatpush.msra.mxu0 0.0
    %103 = vmatpush.msra.mxu0 0.0
    %104 = vmatpush.msra.mxu0 0.0
    %105 = vmatpush.msra.mxu0 0.0
    %106 = vmatpush.msra.mxu0 0.0
    %107 = vmatpush.msra.mxu0 0.0
    %108 = vmatpush.msra.mxu0 0.0
    %109 = vmatpush.msra.mxu0 0.0
    %110 = vmatpush.msra.mxu0 0.0
    %111 = vmatpush.msra.mxu0 0.0
    %112 = vmatpush.msra.mxu0 %v99
    %113 = vmatpush.msra.mxu0 %v96
    %114 = vmatpush.msra.mxu0 %v95
    %115 = vmatpush.msra.mxu0 %v94
    %116 = vmatpush.msra.mxu0 %v93
    %117 = vmatmul.f32.gmra.mxu0 %v36
    %v118 = vpop.f32.mrf.mxu0
    %v119 = vadd.f32 0.0, %v118
    %120 = vdwg.mxu0
    %v121 = vmax.f32 %v91, %v119
    %s122 = scalar_lea.vmem %s0, 120
    %v123 = vld [vmem:[%s122] sm:$0xff]
    %v124 = vld [vmem:[%s122 + $0x8] sm:$0xff]
    %v125 = vld [vmem:[%s122 + $0x10] sm:$0xff]
    %v126 = vld [vmem:[%s122 + $0x18] sm:$0xff]
    %v127 = vld [vmem:[%s122 + $0x20] sm:$0xf]
    %v129 = vsel %vm38, %v127, 0
    %131 = vmatpush.msra.mxu0 0.0
    %132 = vmatpush.msra.mxu0 0.0
    %133 = vmatpush.msra.mxu0 0.0
    %134 = vmatpush.msra.mxu0 0.0
    %135 = vmatpush.msra.mxu0 0.0
    %136 = vmatpush.msra.mxu0 0.0
    %137 = vmatpush.msra.mxu0 0.0
    %138 = vmatpush.msra.mxu0 0.0
    %139 = vmatpush.msra.mxu0 0.0
    %140 = vmatpush.msra.mxu0 0.0
    %141 = vmatpush.msra.mxu0 0.0
    %142 = vmatpush.msra.mxu0 %v129
    %143 = vmatpush.msra.mxu0 %v126
    %144 = vmatpush.msra.mxu0 %v125
    %145 = vmatpush.msra.mxu0 %v124
    %146 = vmatpush.msra.mxu0 %v123
    %147 = vmatmul.f32.gmra.mxu0 %v36
    %v148 = vpop.f32.mrf.mxu0
    %v149 = vadd.f32 0.0, %v148
    %150 = vdwg.mxu0
    %v151 = vmax.f32 %v121, %v149
    %v152 = vld [vmem:[%s2] sm:$0xff]
    %154 = vset.pattern.permute.xlu0 0
    %155 = vperm.xlu0 %154, %v152
    %v156 = vpop.permute.xlu0 %155
    %v158 = vadd.f32 %v151, %v156
    %v159 = vmax.f32 %v158, 0.0
    %v161 = vrot.slane %v159, 1
    %162 = vrot.lane.b32.xlu0 %v161, 64
    %v163 = vpop.permute.xlu0 %162
    %v165 = vrot.slane %v159, 2
    %v167 = vrot.slane %v159, 3
    %168 = vrot.lane.b32.xlu0 %v167, 64
    %v169 = vpop.permute.xlu0 %168
    %v171 = vrot.slane %v159, 4
    %v173 = vrot.slane %v159, 5
    %174 = vrot.lane.b32.xlu0 %v173, 64
    %v175 = vpop.permute.xlu0 %174
    %v177 = vrot.slane %v159, 6
    %v179 = vrot.slane %v159, 7
    %180 = vrot.lane.b32.xlu0 %v179, 64
    %v181 = vpop.permute.xlu0 %180
    %vm183 = vcmask 523264
    %v184 = vsel %vm183, %v159, %v163
    %v185 = vsel %vm183, %v165, %v169
    %v186 = vsel %vm183, %v171, %v175
    %v187 = vsel %vm183, %v177, %v181
    %188 = vrot.lane.b32.xlu0 %v159, 64
    %v189 = vpop.permute.xlu0 %188
    %192 = vrot.lane.b32.xlu0 %v165, 64
    %v193 = vpop.permute.xlu0 %192
    %196 = vrot.lane.b32.xlu0 %v171, 64
    %v197 = vpop.permute.xlu0 %196
    %200 = vrot.lane.b32.xlu0 %v177, 64
    %v201 = vpop.permute.xlu0 %200
    %v204 = vsel %vm183, %v189, %v161
    %v205 = vsel %vm183, %v193, %v167
    %v206 = vsel %vm183, %v197, %v173
    %v207 = vsel %vm183, %v201, %v179
    %v212 = vrot.slane %v204, 7
    %v213 = vrot.slane %v205, 7
    %v214 = vrot.slane %v206, 7
    %v215 = vrot.slane %v207, 7
    %vm220 = vcmask 1040384
    %v221 = vsel %vm220, %v184, %v212
    %v222 = vsel %vm220, %v185, %v213
    %v223 = vsel %vm220, %v186, %v214
    %v224 = vsel %vm220, %v187, %v215
    %v225 = vld [vmem:[%s3] sm:$0xff]
    %v226 = vld [vmem:[%s3 + $0x8] sm:$0xff]
    %v227 = vld [vmem:[%s3 + $0x10] sm:$0xff]
    %v228 = vld [vmem:[%s3 + $0x18] sm:$0xff]
    %v229 = vld [vmem:[%s3 + $0x20] sm:$0xff]
    %v230 = vld [vmem:[%s3 + $0x28] sm:$0xff]
    %v231 = vld [vmem:[%s3 + $0x30] sm:$0xff]
    %v232 = vld [vmem:[%s3 + $0x38] sm:$0xff]
    %v233 = vld [vmem:[%s3 + $0x40] sm:$0xff]
    %v234 = vld [vmem:[%s3 + $0x48] sm:$0xff]
    %v235 = vld [vmem:[%s3 + $0x50] sm:$0xff]
    %v236 = vld [vmem:[%s3 + $0x58] sm:$0xff]
    %v237 = vld [vmem:[%s3 + $0x60] sm:$0xff]
    %v238 = vld [vmem:[%s3 + $0x68] sm:$0xff]
    %v239 = vld [vmem:[%s3 + $0x70] sm:$0xff]
    %v240 = vld [vmem:[%s3 + $0x78] sm:$0xff]
    %v241 = vld [vmem:[%s3 + $0x80] sm:$0xff]
    %v242 = vld [vmem:[%s3 + $0x88] sm:$0xff]
    %v243 = vld [vmem:[%s3 + $0x90] sm:$0xff]
    %v244 = vld [vmem:[%s3 + $0x98] sm:$0xff]
    %v245 = vld [vmem:[%s3 + $0xa0] sm:$0xff]
    %v246 = vld [vmem:[%s3 + $0xa8] sm:$0xff]
    %v247 = vld [vmem:[%s3 + $0xb0] sm:$0xff]
    %v248 = vld [vmem:[%s3 + $0xb8] sm:$0xff]
    %v249 = vld [vmem:[%s3 + $0xc0] sm:$0xff]
    %v250 = vld [vmem:[%s3 + $0xc8] sm:$0xff]
    %v251 = vld [vmem:[%s3 + $0xd0] sm:$0xff]
    %v252 = vld [vmem:[%s3 + $0xd8] sm:$0xff]
    %v253 = vld [vmem:[%s3 + $0xe0] sm:$0xff]
    %v254 = vld [vmem:[%s3 + $0xe8] sm:$0xff]
    %v255 = vld [vmem:[%s3 + $0xf0] sm:$0xff]
    %v256 = vld [vmem:[%s3 + $0xf8] sm:$0xff]
    %v257 = vld [vmem:[%s3 + $0x100] sm:$0xff]
    %v258 = vld [vmem:[%s3 + $0x108] sm:$0xff]
    %v259 = vld [vmem:[%s3 + $0x110] sm:$0xff]
    %v260 = vld [vmem:[%s3 + $0x118] sm:$0xff]
    %v261 = vld [vmem:[%s3 + $0x120] sm:$0xff]
    %v262 = vld [vmem:[%s3 + $0x128] sm:$0xff]
    %v263 = vld [vmem:[%s3 + $0x130] sm:$0xff]
    %v264 = vld [vmem:[%s3 + $0x138] sm:$0xff]
    %v265 = vld [vmem:[%s3 + $0x140] sm:$0xff]
    %v266 = vld [vmem:[%s3 + $0x148] sm:$0xff]
    %v267 = vld [vmem:[%s3 + $0x150] sm:$0xff]
    %v268 = vld [vmem:[%s3 + $0x158] sm:$0xff]
    %v269 = vld [vmem:[%s3 + $0x160] sm:$0xff]
    %v270 = vld [vmem:[%s3 + $0x168] sm:$0xff]
    %v271 = vld [vmem:[%s3 + $0x170] sm:$0xff]
    %v272 = vld [vmem:[%s3 + $0x178] sm:$0xff]
    %v273 = vld [vmem:[%s3 + $0x180] sm:$0xff]
    %v274 = vld [vmem:[%s3 + $0x188] sm:$0xff]
    %v275 = vld [vmem:[%s3 + $0x190] sm:$0xff]
    %v276 = vld [vmem:[%s3 + $0x198] sm:$0xff]
    %v277 = vld [vmem:[%s3 + $0x1a0] sm:$0xff]
    %v278 = vld [vmem:[%s3 + $0x1a8] sm:$0xff]
    %v279 = vld [vmem:[%s3 + $0x1b0] sm:$0xff]
    %v280 = vld [vmem:[%s3 + $0x1b8] sm:$0xff]
    %v281 = vld [vmem:[%s3 + $0x1c0] sm:$0xff]
    %v282 = vld [vmem:[%s3 + $0x1c8] sm:$0xff]
    %v283 = vld [vmem:[%s3 + $0x1d0] sm:$0xff]
    %v284 = vld [vmem:[%s3 + $0x1d8] sm:$0xff]
    %v285 = vld [vmem:[%s3 + $0x1e0] sm:$0xff]
    %v286 = vld [vmem:[%s3 + $0x1e8] sm:$0xff]
    %v287 = vld [vmem:[%s3 + $0x1f0] sm:$0xff]
    %v288 = vld [vmem:[%s3 + $0x1f8] sm:$0xff]
    %v289 = vld [vmem:[%s4] sm:$0x1]
    %v291 = vperm.slane %v289, 0
    %293 = vmatpush.msra.mxu0 %v240
    %294 = vmatpush.msra.mxu0 %v239
    %295 = vmatpush.msra.mxu0 %v238
    %296 = vmatpush.msra.mxu0 %v237
    %297 = vmatpush.msra.mxu0 %v236
    %298 = vmatpush.msra.mxu0 %v235
    %299 = vmatpush.msra.mxu0 %v234
    %300 = vmatpush.msra.mxu0 %v233
    %301 = vmatpush.msra.mxu0 %v232
    %302 = vmatpush.msra.mxu0 %v231
    %303 = vmatpush.msra.mxu0 %v230
    %304 = vmatpush.msra.mxu0 %v229
    %305 = vmatpush.msra.mxu0 %v228
    %306 = vmatpush.msra.mxu0 %v227
    %307 = vmatpush.msra.mxu0 %v226
    %308 = vmatpush.msra.mxu0 %v225
    %309 = vmatmul.f32.gmra.mxu0 %v221
    %v310 = vpop.f32.mrf.mxu0
    %v311 = vadd.f32 %v291, %v310
    %312 = vdwg.mxu0
    %313 = vmatpush.msra.mxu0 %v256
    %314 = vmatpush.msra.mxu0 %v255
    %315 = vmatpush.msra.mxu0 %v254
    %316 = vmatpush.msra.mxu0 %v253
    %317 = vmatpush.msra.mxu0 %v252
    %318 = vmatpush.msra.mxu0 %v251
    %319 = vmatpush.msra.mxu0 %v250
    %320 = vmatpush.msra.mxu0 %v249
    %321 = vmatpush.msra.mxu0 %v248
    %322 = vmatpush.msra.mxu0 %v247
    %323 = vmatpush.msra.mxu0 %v246
    %324 = vmatpush.msra.mxu0 %v245
    %325 = vmatpush.msra.mxu0 %v244
    %326 = vmatpush.msra.mxu0 %v243
    %327 = vmatpush.msra.mxu0 %v242
    %328 = vmatpush.msra.mxu0 %v241
    %329 = vmatmul.f32.gmra.mxu0 %v222
    %v330 = vpop.f32.mrf.mxu0
    %v331 = vadd.f32 %v311, %v330
    %332 = vdwg.mxu0
    %333 = vmatpush.msra.mxu0 %v272
    %334 = vmatpush.msra.mxu0 %v271
    %335 = vmatpush.msra.mxu0 %v270
    %336 = vmatpush.msra.mxu0 %v269
    %337 = vmatpush.msra.mxu0 %v268
    %338 = vmatpush.msra.mxu0 %v267
    %339 = vmatpush.msra.mxu0 %v266
    %340 = vmatpush.msra.mxu0 %v265
    %341 = vmatpush.msra.mxu0 %v264
    %342 = vmatpush.msra.mxu0 %v263
    %343 = vmatpush.msra.mxu0 %v262
    %344 = vmatpush.msra.mxu0 %v261
    %345 = vmatpush.msra.mxu0 %v260
    %346 = vmatpush.msra.mxu0 %v259
    %347 = vmatpush.msra.mxu0 %v258
    %348 = vmatpush.msra.mxu0 %v257
    %349 = vmatmul.f32.gmra.mxu0 %v223
    %v350 = vpop.f32.mrf.mxu0
    %v351 = vadd.f32 %v331, %v350
    %352 = vdwg.mxu0
    %353 = vmatpush.msra.mxu0 %v288
    %354 = vmatpush.msra.mxu0 %v287
    %355 = vmatpush.msra.mxu0 %v286
    %356 = vmatpush.msra.mxu0 %v285
    %357 = vmatpush.msra.mxu0 %v284
    %358 = vmatpush.msra.mxu0 %v283
    %359 = vmatpush.msra.mxu0 %v282
    %360 = vmatpush.msra.mxu0 %v281
    %361 = vmatpush.msra.mxu0 %v280
    %362 = vmatpush.msra.mxu0 %v279
    %363 = vmatpush.msra.mxu0 %v278
    %364 = vmatpush.msra.mxu0 %v277
    %365 = vmatpush.msra.mxu0 %v276
    %366 = vmatpush.msra.mxu0 %v275
    %367 = vmatpush.msra.mxu0 %v274
    %368 = vmatpush.msra.mxu0 %v273
    %369 = vmatmul.f32.gmra.mxu0 %v224
    %v370 = vpop.f32.mrf.mxu0
    %v371 = vadd.f32 %v351, %v370
    %372 = vdwg.mxu0
    %v373 = vmax.f32 %v371, 0.0
    %v374 = vld [vmem:[%s5] sm:$0x1]
    %v376 = vperm.slane %v374, 0
    %v378 = vmul.f32 %v373, %v376
    %vm379 = vcmask 254976
    %v380 = vsel %vm379, %v378, 0.0
    %381 = vadd.xlane.f32.xlu0 %v380
    %v382 = vpop.xlane.xlu0 %381
    %s383 = sld [smem:[#allocation2]]
    %v384 = vstv %s383
    %v385 = vadd.f32 %v382, %v384
    %v386 = vsub.f32 0.0, %v385
    %v387 = vmul.f32 %v386, 1.442695
    %v388 = vpow.pop %v387
    %v389 = vadd.f32 %v388, 1.0
    %v390 = vrcp.pop %v389
    %v391 = vmul.f32 %v389, %v390
    %v392 = vsub.f32 1.0, %v391
    %v393 = vmul.f32 %v390, %v392
    %v394 = vadd.f32 %v390, %v393
    %vm395 = vweird.f32 %v389
    %vm396 = vweird.f32 %v390
    %vm397 = vmor %vm395, %vm396
    %v398 = vsel %vm397, %v390, %v394
    %v399 = vand.u32 2147483647, %v389
    %vm400 = vcmp.eq.f32.partialorder %v399, 8.507059e+37
    %v401 = vand.u32 %v389, 2147483648
    %v402 = vor.u32 1.1754944e-38, %v401
    %v403 = vsel %vm400, %v402, %v398
    %v404 = vmul.f32 1.0, %v403
    %405 = vst [vmem:[#allocation3] sm:$0x3] %v404
    // Predicated region
    $region30: #{tpu_custom_call.1} parent=1 // pred_check
      _
    $region31: #{tpu_custom_call.1} parent=1 // pred_check_branch
      %407 = sbr.rel (0) target = $region33
    $region32: #{tpu_custom_call.1} parent=1 // pred_region
      %409 = vsyncadd [#allocation4], 0
      %s411 = sshll.u32 [#allocation3], 4
      %s412 = int_to_ptr.vmem [resolvable:$true] %s411
      %s413 = sshll.u32 %s7, 4
      %s414 = int_to_ptr.hbm [resolvable:$true] %s413
      %416 = dma.vmem_to_hbm [thread:$0]  %s412, 32, %s414, [#allocation4]
    $region33: #{tpu_custom_call.1} parent=1 // pred_fallthru
      _
    // Predicated region
    $region34: #{tpu_custom_call.1} parent=1 // pred_check
      _
    $region35: #{tpu_custom_call.1} parent=1 // pred_check_branch
      %418 = sbr.rel (0) target = $region37
    $region36: #{tpu_custom_call.1} parent=1 // pred_region
      %420 = dma.done [#allocation4], 32
    $region37: #{tpu_custom_call.1} parent=1 // pred_fallthru
      _
    %421 = vsyncpa [#allocation4], 1

</llo_original>
